<compile_context>
chip_gen: v7x
topology: tpu7x:2x2x1
jax: 0.10.0
libtpu: 0.0.40
codegen_flags: <defaults>
</compile_context>

<pallas_src>
import functools

import jax
import jax.numpy as jnp
from jax.experimental import pallas as pl
from jax.experimental.pallas import tpu as pltpu


def _layernorm_kernel(x_ref, a_ref, b_ref, o_ref, *, eps, n_features):
    # x_ref: (row_tile, H)  rows of the flattened input, H on the lane axis
    # a_ref: (1, H)         scale (a_2), resident across the grid
    # b_ref: (1, H)         shift (b_2), resident across the grid
    # o_ref: (row_tile, H)  output block
    x = x_ref[...].astype(jnp.float32)                       # (Nt, H)

    # One pass over x: both row sums are lane (XLU) reductions of resident
    # data, issued back-to-back.
    s1 = jnp.sum(x, axis=-1, keepdims=True)                  # (Nt, 1)
    s2 = jnp.sum(x * x, axis=-1, keepdims=True)              # (Nt, 1)
    mean = s1 * (1.0 / n_features)
    # torch.std(-1) is the *unbiased* estimator (divide by H-1); eps is added
    # to std (not variance), so it cannot be folded into an rsqrt.
    var = (s2 - s1 * mean) * (1.0 / max(n_features - 1, 1))
    var = jnp.maximum(var, 0.0)                               # guard f32 rounding
    inv = 1.0 / (jnp.sqrt(var) + eps)                         # exact (1e-5 tol)

    a = a_ref[...].astype(jnp.float32)                        # (1, H)
    b = b_ref[...].astype(jnp.float32)                        # (1, H)
    y = ((x - mean) * inv) * a + b                            # (Nt,1)/(1,H) broadcasts
    o_ref[...] = y.astype(o_ref.dtype)


def _vmem_capacity_bytes():
    """Physical VMEM of the current TPU; conservative (v7x) fallback."""
    try:
        return int(pltpu.get_tpu_info().vmem_capacity_bytes)
    except Exception:
        return 64 << 20


def _pick_row_tile(n_rows, h, itemsize, vmem_capacity):
    """Byte-budget-aware row tile.

    Targets a multi-MiB (row_tile, H) block (measured 85%+ of HBM roofline),
    scaled off physical VMEM so the double-buffered footprint fits every
    generation, rounded to the dtype's sublane packing, and capped so the
    grid keeps >= ~4 steps for megacore sharding / pipeline overlap.
    """
    sub = {1: 32, 2: 16}.get(itemsize, 8)          # rows per packed sublane group
    # ~1/32 of physical VMEM per x block, clamped to [1, 8] MiB:
    #   v5e/v6e (128 MiB) -> 4 MiB blocks, v7x (64 MiB) -> 2 MiB blocks.
    target = min(max(vmem_capacity // 32, 1 << 20), 8 << 20)
    row_bytes = max(h * itemsize, 1)
    t = max(sub, target // row_bytes)
    t = min(t, max(sub, pl.cdiv(n_rows, 4)))       # keep >= ~4 grid steps if possible
    t = min(t, max(n_rows, 1))
    t = max(sub, (t // sub) * sub)                 # sublane-packed
    return int(t)


def layer_norm(x, a2, b2, eps=1e-6, row_tile=None):
    """x: (..., H); a2, b2: (H,). Returns LayerNorm(x) with PyTorch semantics."""
    orig_shape = x.shape
    H = orig_shape[-1]
    N = 1
    for s in orig_shape[:-1]:
        N *= s

    x2 = x.reshape(N, H)
    a2r = jnp.asarray(a2).reshape(1, H)            # keep param dtype (usually f32)
    b2r = jnp.asarray(b2).reshape(1, H)

    itemsize = jnp.dtype(x.dtype).itemsize
    vmem_cap = _vmem_capacity_bytes()
    if row_tile is None:
        row_tile = _pick_row_tile(N, H, itemsize, vmem_cap)

    grid = pl.cdiv(N, row_tile)
    n_pad = grid * row_tile
    if n_pad != N:
        # Zero-pad the row axis; padded rows produce harmless finite values
        # and are sliced off below (avoids the per-row masked-store cliff).
        x2 = jnp.pad(x2, ((0, n_pad - N), (0, 0)))

    # Scoped-VMEM budget: double-buffered x + out blocks, a couple of
    # tile-sized f32 temporaries, the resident (1, H) params, plus margin.
    blk_bytes = row_tile * H * itemsize
    footprint = 4 * blk_bytes + 2 * row_tile * H * 4 + 4 * H * 4 + (1 << 20)
    vmem_limit = int(max(footprint + (4 << 20), min(vmem_cap // 2, 32 << 20)))

    out = pl.pallas_call(
        functools.partial(_layernorm_kernel, eps=eps, n_features=H),
        out_shape=jax.ShapeDtypeStruct((n_pad, H), x.dtype),
        grid_spec=pltpu.PrefetchScalarGridSpec(
            num_scalar_prefetch=0,
            grid=(grid,),
            in_specs=[
                pl.BlockSpec((row_tile, H), lambda i: (i, 0)),   # x rows
                pl.BlockSpec((1, H), lambda i: (0, 0)),          # a_2 (resident)
                pl.BlockSpec((1, H), lambda i: (0, 0)),          # b_2 (resident)
            ],
            out_specs=pl.BlockSpec((row_tile, H), lambda i: (i, 0)),
        ),
        compiler_params=pltpu.CompilerParams(
            dimension_semantics=("parallel",),
            vmem_limit_bytes=vmem_limit,
        ),
    )(x2, a2r, b2r)

    if n_pad != N:
        out = out[:N]
    return out.reshape(orig_shape)


def layer_norm_ref(x, a2, b2, eps=1e-6):
    """Pure-JAX reference mirroring the PyTorch forward (unbiased std, eps on std)."""
    mean = jnp.mean(x, axis=-1, keepdims=True)
    std = jnp.std(x, axis=-1, ddof=1, keepdims=True)
    return a2 * (x - mean) / (std + eps) + b2


if __name__ == "__main__":
    B, S, H = 2, 8, 32

    key = jax.random.PRNGKey(0)
    k_x, k_a, k_b, k_y = jax.random.split(key, 4)
    x = jax.random.normal(k_x, (B, S, H), jnp.float32)

    # 1) Module-default parameters: a_2 = ones, b_2 = zeros.
    a2 = jnp.ones((H,), jnp.float32)
    b2 = jnp.zeros((H,), jnp.float32)
    out = jax.block_until_ready(layer_norm(x, a2, b2))
    ref = layer_norm_ref(x, a2, b2)
    assert out.shape == (B, S, H)
    assert jnp.allclose(out, ref, atol=1e-5, rtol=1e-5), "mismatch (default params)"

    # 2) Non-trivial learned parameters exercise the scale/shift path.
    a2r = 1.0 + 0.1 * jax.random.normal(k_a, (H,), jnp.float32)
    b2r = 0.1 * jax.random.normal(k_b, (H,), jnp.float32)
    out_r = jax.block_until_ready(layer_norm(x, a2r, b2r))
    ref_r = layer_norm_ref(x, a2r, b2r)
    assert jnp.allclose(out_r, ref_r, atol=1e-5, rtol=1e-5), "mismatch (random params)"

    # 3) Awkward row count (N=15, not a multiple of the sublane packing):
    #    exercises the cdiv grid + row-padding path.
    y = jax.random.normal(k_y, (3, 5, H), jnp.float32)
    out_y = jax.block_until_ready(layer_norm(y, a2r, b2r))
    ref_y = layer_norm_ref(y, a2r, b2r)
    assert out_y.shape == (3, 5, H)
    assert jnp.allclose(out_y, ref_y, atol=1e-5, rtol=1e-5), "mismatch (padded N)"

    print("KERNEL_OK")
</pallas_src>

<mosaic_0001>
module attributes {stable_mosaic.version = 11 : i64} {
  func.func @_layernorm_kernel(%arg0: i32, %arg1: memref<8x32xf32, #tpu.memory_space<vmem>>, %arg2: memref<1x32xf32, #tpu.memory_space<vmem>>, %arg3: memref<1x32xf32, #tpu.memory_space<vmem>>, %arg4: memref<8x32xf32, #tpu.memory_space<vmem>>) attributes {dimension_semantics = [#tpu.dimension_semantics<parallel>], iteration_bounds = array<i64: 2>, scalar_prefetch = 0 : i64, scratch_operands = 0 : i64, tpu.core_type = #tpu.core_type<tc>, window_params = [{transform_indices = @transform_0, window_bounds = array<i64: 8, 32>}, {pipeline_mode = #tpu.pipeline_mode<synchronous>, transform_indices = @transform_1, window_bounds = array<i64: 1, 32>}, {pipeline_mode = #tpu.pipeline_mode<synchronous>, transform_indices = @transform_2, window_bounds = array<i64: 1, 32>}, {transform_indices = @transform_3, window_bounds = array<i64: 8, 32>}]} {
    %c0 = arith.constant 0 : index
    %c0_0 = arith.constant 0 : index
    %0 = vector.load %arg1[%c0, %c0_0] : memref<8x32xf32, #tpu.memory_space<vmem>>, vector<8x32xf32>
    %cst = arith.constant dense<0.000000e+00> : vector<8xf32>
    %1 = vector.multi_reduction <add>, %0, %cst [1] : vector<8x32xf32> to vector<8xf32>
    %2 = vector.shape_cast %1 : vector<8xf32> to vector<8x1xf32>
    %3 = arith.mulf %0, %0 : vector<8x32xf32>
    %cst_1 = arith.constant dense<0.000000e+00> : vector<8xf32>
    %4 = vector.multi_reduction <add>, %3, %cst_1 [1] : vector<8x32xf32> to vector<8xf32>
    %5 = vector.shape_cast %4 : vector<8xf32> to vector<8x1xf32>
    %cst_2 = arith.constant 3.125000e-02 : f32
    %6 = vector.broadcast %cst_2 : f32 to vector<8x1xf32>
    %7 = arith.mulf %2, %6 : vector<8x1xf32>
    %8 = arith.mulf %2, %7 : vector<8x1xf32>
    %9 = arith.subf %5, %8 : vector<8x1xf32>
    %cst_3 = arith.constant 0.0322580636 : f32
    %10 = vector.broadcast %cst_3 : f32 to vector<8x1xf32>
    %11 = arith.mulf %9, %10 : vector<8x1xf32>
    %cst_4 = arith.constant 0.000000e+00 : f32
    %12 = vector.broadcast %cst_4 : f32 to vector<8x1xf32>
    %13 = arith.maximumf %11, %12 : vector<8x1xf32>
    %14 = math.sqrt %13 : vector<8x1xf32>
    %cst_5 = arith.constant 9.99999997E-7 : f32
    %15 = vector.broadcast %cst_5 : f32 to vector<8x1xf32>
    %16 = arith.addf %14, %15 : vector<8x1xf32>
    %cst_6 = arith.constant 1.000000e+00 : f32
    %17 = vector.broadcast %cst_6 : f32 to vector<8x1xf32>
    %18 = arith.divf %17, %16 : vector<8x1xf32>
    %c0_7 = arith.constant 0 : index
    %c0_8 = arith.constant 0 : index
    %19 = vector.load %arg2[%c0_7, %c0_8] : memref<1x32xf32, #tpu.memory_space<vmem>>, vector<1x32xf32>
    %c0_9 = arith.constant 0 : index
    %c0_10 = arith.constant 0 : index
    %20 = vector.load %arg3[%c0_9, %c0_10] : memref<1x32xf32, #tpu.memory_space<vmem>>, vector<1x32xf32>
    %21 = vector.broadcast %7 : vector<8x1xf32> to vector<8x32xf32>
    %22 = arith.subf %0, %21 : vector<8x32xf32>
    %23 = vector.broadcast %18 : vector<8x1xf32> to vector<8x32xf32>
    %24 = arith.mulf %22, %23 : vector<8x32xf32>
    %25 = vector.broadcast %19 : vector<1x32xf32> to vector<8x32xf32>
    %26 = arith.mulf %24, %25 : vector<8x32xf32>
    %27 = vector.broadcast %20 : vector<1x32xf32> to vector<8x32xf32>
    %28 = arith.addf %26, %27 : vector<8x32xf32>
    %c0_11 = arith.constant 0 : index
    %c0_12 = arith.constant 0 : index
    %29 = vector.load %arg4[%c0_11, %c0_12] : memref<8x32xf32, #tpu.memory_space<vmem>>, vector<8x32xf32>
    tpu.vector_store %arg4[%c0_11, %c0_12], %28 {strides = array<i32>} : memref<8x32xf32, #tpu.memory_space<vmem>>, vector<8x32xf32>,
    return
  }
  func.func @transform_0(%arg0: i32) -> (i32, i32) {
    %c0_i32 = arith.constant 0 : i32
    %c0_i32_0 = arith.constant 0 : i32
    return %arg0, %c0_i32 : i32, i32
  }
  func.func @transform_1(%arg0: i32) -> (i32, i32) {
    %c0_i32 = arith.constant 0 : i32
    %c0_i32_0 = arith.constant 0 : i32
    %c0_i32_1 = arith.constant 0 : i32
    return %c0_i32, %c0_i32_0 : i32, i32
  }
  func.func @transform_2(%arg0: i32) -> (i32, i32) {
    %c0_i32 = arith.constant 0 : i32
    %c0_i32_0 = arith.constant 0 : i32
    %c0_i32_1 = arith.constant 0 : i32
    return %c0_i32, %c0_i32_0 : i32, i32
  }
  func.func @transform_3(%arg0: i32) -> (i32, i32) {
    %c0_i32 = arith.constant 0 : i32
    %c0_i32_0 = arith.constant 0 : i32
    return %arg0, %c0_i32 : i32, i32
  }
}

</mosaic_0001>

<llo_original>
// kernel: tpu_custom_call.1
$region0: #{tpu_custom_call.1}
  #allocation0 [shape = 'u32[]', space=smem, size = 0x4, offset = 0x4, fixed_abs, tag = 'smem constant byte address 0x4 - core index']
  #allocation1 [shape = 'u32[144,128]{1,0:T(1,128)}', space=vmem, size = 0x12000, scoped, tag = 'internal scratch']
  %s0 = inlined_call_operand.hbm [shape: f32[16,32], index: 0, kind: input, shape index: {}]
  %s1 = inlined_call_operand.vmem [shape: f32[1,32], index: 1, kind: input, shape index: {}]
  %s2 = inlined_call_operand.vmem [shape: f32[1,32], index: 2, kind: input, shape index: {}]
  %s3 = inlined_call_operand.hbm [shape: f32[16,32], index: 3, kind: output, shape index: {}]
  %s4 = sld [smem:[#allocation0]]
  $region49: #{tpu_custom_call.1} parent=0
    _
  %s6 = ssub.s32 1, %s4
  %s7 = scalar_select 0, %s6, %s4
  $region1: #{tpu_custom_call.1} parent=0
    #allocation2 [shape = 'u8[8192]{0}', space=vmem, size = 0x2000, scoped, tag = 'input window, operand 0']
    #allocation3 [shape = 's32[2]{0}', space=sflag, size = 0x8, scoped, tag = 'scoped memory for tpu_custom_call.1']
    #allocation4 [shape = 's32[2]{0}', space=sflag, size = 0x8, scoped, tag = 'scoped memory for tpu_custom_call.1']
    #allocation5 [shape = 'u8[8192]{0}', space=vmem, size = 0x2000, scoped, tag = 'output window, operand 0']
    %8 = vsyncpa [#allocation3], 0
    %s9 = scalar_lea.sflag [#allocation3], 1
    %10 = vsyncpa %s9, 0
    %11 = vsyncpa [#allocation4], 0
    %s12 = scalar_lea.sflag [#allocation4], 1
    %13 = vsyncpa %s12, 0
    loop: start=0, step=1, limit=4
    $region2: #{tpu_custom_call.1} parent=1 // loop_pre_header
      _
    $region3: #{tpu_custom_call.1} parent=1 // loop_header
      %s15 = sphi 0, %s19
      %p16 = scmp.ge.s32.totalorder %s15, 4
      %s25 = sphi 0, %s27
      %s28 = sphi 0, %s25
      %s29 = sphi 0, %s28
      %s45 = sphi 0, %s29
      %s49 = sphi 0, %s49
      %s51 = sphi 0, %s49
      %s52 = sphi 0, %s51
      %s66 = sphi 0, %s52
      %s70 = sphi 0, %s70
      %s72 = sphi 0, %s70
      %s73 = sphi 0, %s72
      %s87 = sphi 0, %s73
      %s93 = sphi 0, %s95
      %s96 = sphi 0, %s93
      %s97 = sphi 0, %s96
      %s113 = sphi 0, %s97
    $region4: #{tpu_custom_call.1} parent=1 // loop_header_branch
      %18 = sbr.rel (%p16) target = $region8
    $region5: #{tpu_custom_call.1} parent=1 // loop_body
      %s20 = ssub.s32 %s15, 1
      %s21 = ssub.s32 %s15, 2
      %s22 = sadd.s32 %s15, 1
      %s23 = ssub.s32 %s15, %s22
      %p24 = scmp.eq.s32.totalorder %s23, 0
      %s26 = sadd.s32 %s25, 1
      %s27 = scalar_select %p24, %s25, %s26
      %p30 = pneg %p24
      %p31 = scmp.eq.s32.totalorder %s15, 1
      %p32 = por %p30, %p31
      %p33 = scmp.ne.s32.totalorder %s25, %s28
      %p34 = scmp.eq.s32.totalorder %s15, 0
      %p35 = por %p33, %p34
      %p36 = scmp.ne.s32.totalorder %s25, %s28
      %p37 = scmp.eq.s32.totalorder %s20, 1
      %p38 = por %p36, %p37
      %p39 = scmp.ne.s32.totalorder %s28, %s29
      %p40 = scmp.eq.s32.totalorder %s20, 0
      %p41 = por %p39, %p40
      %p42 = scmp.ne.s32.totalorder %s28, %s29
      %p43 = scmp.eq.s32.totalorder %s21, 1
      %p44 = por %p42, %p43
      %p46 = scmp.ne.s32.totalorder %s29, %s45
      %p47 = scmp.eq.s32.totalorder %s21, 0
      %p48 = por %p46, %p47
      %s50 = sadd.s32 %s49, 1
      %p53 = scmp.eq.s32.totalorder %s15, 1
      %p54 = scmp.ne.s32.totalorder %s49, %s51
      %p55 = scmp.eq.s32.totalorder %s15, 0
      %p56 = por %p54, %p55
      %p57 = scmp.ne.s32.totalorder %s49, %s51
      %p58 = scmp.eq.s32.totalorder %s20, 1
      %p59 = por %p57, %p58
      %p60 = scmp.ne.s32.totalorder %s51, %s52
      %p61 = scmp.eq.s32.totalorder %s20, 0
      %p62 = por %p60, %p61
      %p63 = scmp.ne.s32.totalorder %s51, %s52
      %p64 = scmp.eq.s32.totalorder %s21, 1
      %p65 = por %p63, %p64
      %p67 = scmp.ne.s32.totalorder %s52, %s66
      %p68 = scmp.eq.s32.totalorder %s21, 0
      %p69 = por %p67, %p68
      %s71 = sadd.s32 %s70, 1
      %p74 = scmp.eq.s32.totalorder %s15, 1
      %p75 = scmp.ne.s32.totalorder %s70, %s72
      %p76 = scmp.eq.s32.totalorder %s15, 0
      %p77 = por %p75, %p76
      %p78 = scmp.ne.s32.totalorder %s70, %s72
      %p79 = scmp.eq.s32.totalorder %s20, 1
      %p80 = por %p78, %p79
      %p81 = scmp.ne.s32.totalorder %s72, %s73
      %p82 = scmp.eq.s32.totalorder %s20, 0
      %p83 = por %p81, %p82
      %p84 = scmp.ne.s32.totalorder %s72, %s73
      %p85 = scmp.eq.s32.totalorder %s21, 1
      %p86 = por %p84, %p85
      %p88 = scmp.ne.s32.totalorder %s73, %s87
      %p89 = scmp.eq.s32.totalorder %s21, 0
      %p90 = por %p88, %p89
      %s91 = ssub.s32 %s15, %s22
      %p92 = scmp.eq.s32.totalorder %s91, 0
      %s94 = sadd.s32 %s93, 1
      %s95 = scalar_select %p92, %s93, %s94
      %p98 = pneg %p92
      %p99 = scmp.eq.s32.totalorder %s15, 1
      %p100 = por %p98, %p99
      %p101 = scmp.ne.s32.totalorder %s93, %s96
      %p102 = scmp.eq.s32.totalorder %s15, 0
      %p103 = por %p101, %p102
      %p104 = scmp.ne.s32.totalorder %s93, %s96
      %p105 = scmp.eq.s32.totalorder %s20, 1
      %p106 = por %p104, %p105
      %p107 = scmp.ne.s32.totalorder %s96, %s97
      %p108 = scmp.eq.s32.totalorder %s20, 0
      %p109 = por %p107, %p108
      %p110 = scmp.ne.s32.totalorder %s96, %s97
      %p111 = scmp.eq.s32.totalorder %s21, 1
      %p112 = por %p110, %p111
      %p114 = scmp.ne.s32.totalorder %s97, %s113
      %p115 = scmp.eq.s32.totalorder %s21, 0
      %p116 = por %p114, %p115
      %p117 = scmp.le.s32.totalorder 1, %s15
      %p118 = scmp.lt.s32.totalorder %s15, 3
      %p119 = pnand %p117, %p118
      %p120 = pneg %p119
      // Predicated region
      $region9: #{tpu_custom_call.1} parent=5 // pred_check
        _
      $region10: #{tpu_custom_call.1} parent=5 // pred_check_branch
        %122 = sbr.rel (%p119) target = $region12
      $region11: #{tpu_custom_call.1} parent=5 // pred_region
        %s123 = ssub.s32 %s15, 1
        // Predicated region
        $region13: #{tpu_custom_call.1} parent=11 // pred_check
          %p124 = pneg %p62
        $region14: #{tpu_custom_call.1} parent=11 // pred_check_branch
          %126 = sbr.rel (%p124) target = $region16
        $region15: #{tpu_custom_call.1} parent=11 // pred_region
          _
        $region16: #{tpu_custom_call.1} parent=11 // pred_fallthru
          _
        // Predicated region
        $region17: #{tpu_custom_call.1} parent=11 // pred_check
          %p127 = pneg %p83
        $region18: #{tpu_custom_call.1} parent=11 // pred_check_branch
          %129 = sbr.rel (%p127) target = $region20
        $region19: #{tpu_custom_call.1} parent=11 // pred_region
          _
        $region20: #{tpu_custom_call.1} parent=11 // pred_fallthru
          _
      $region12: #{tpu_custom_call.1} parent=5 // pred_fallthru
        _
      %p130 = scmp.lt.s32.totalorder %s15, 2
      // Predicated region
      $region21: #{tpu_custom_call.1} parent=5 // pred_check
        %p131 = pneg %p130
      $region22: #{tpu_custom_call.1} parent=5 // pred_check_branch
        %133 = sbr.rel (%p131) target = $region24
      $region23: #{tpu_custom_call.1} parent=5 // pred_region
        // Predicated region
        $region25: #{tpu_custom_call.1} parent=23 // pred_check
          %p134 = pneg %p35
        $region26: #{tpu_custom_call.1} parent=23 // pred_check_branch
          %136 = sbr.rel (%p134) target = $region28
        $region27: #{tpu_custom_call.1} parent=23 // pred_region
          %s137 = sand.u32 %s25, 1
          %s138 = scalar_lea.sflag [#allocation3], %s137
          %s139 = sand.u32 %s25, 1
          %s140 = smul.addr %s139, 8
          %s141 = scalar_lea.vmem [#allocation2], %s140
          %s143 = ssub.s32 128, 128
          %144 = vsyncadd %s138, %s143
          %s145 = smul.addr %s15, 128
          %s146 = scalar_lea.hbm %s0, %s145
          %s148 = sshll.u32 %s141, 4
          %s149 = int_to_ptr.vmem [resolvable:$true] %s148
          %151 = dma.hbm_to_vmem [thread:$0]  %s146, 128, %s149, %s138
        $region28: #{tpu_custom_call.1} parent=23 // pred_fallthru
          _
      $region24: #{tpu_custom_call.1} parent=5 // pred_fallthru
        _
      %p152 = scmp.le.s32.totalorder 1, %s15
      %p153 = scmp.lt.s32.totalorder %s15, 3
      %p154 = pnand %p152, %p153
      %p155 = pneg %p154
      // Predicated region
      $region29: #{tpu_custom_call.1} parent=5 // pred_check
        _
      $region30: #{tpu_custom_call.1} parent=5 // pred_check_branch
        %157 = sbr.rel (%p154) target = $region32
      $region31: #{tpu_custom_call.1} parent=5 // pred_region
        %s158 = ssub.s32 %s15, 1
        %s159 = sand.u32 %s28, 1
        %s160 = scalar_lea.sflag [#allocation3], %s159
        %s161 = sand.u32 %s28, 1
        %s162 = smul.addr %s161, 8
        %s163 = scalar_lea.vmem [#allocation2], %s162
        // Predicated region
        $region33: #{tpu_custom_call.1} parent=31 // pred_check
          %p164 = pneg %p41
        $region34: #{tpu_custom_call.1} parent=31 // pred_check_branch
          %166 = sbr.rel (%p164) target = $region36
        $region35: #{tpu_custom_call.1} parent=31 // pred_region
          %167 = dma.done %s160, 128
        $region36: #{tpu_custom_call.1} parent=31 // pred_fallthru
          _
        %s168 = sand.u32 %s28, 1
        %s169 = scalar_lea.sflag [#allocation3], %s168
        %s170 = sand.u32 %s28, 1
        %s171 = smul.addr %s170, 8
        %s172 = scalar_lea.vmem [#allocation2], %s171
        %p173 = pneg %p41
        %p174 = pneg %p38
        %p175 = pneg %p62
        %p176 = pneg %p59
        %p177 = pneg %p83
        %p178 = pneg %p80
        %p179 = pneg %p109
        %p180 = pneg %p106
        %s181 = sand.u32 %s96, 1
        %s182 = scalar_lea.sflag [#allocation4], %s181
        %s183 = sand.u32 %s96, 1
        %s184 = smul.addr %s183, 8
        %s185 = scalar_lea.vmem [#allocation5], %s184
        %v186 = vld [vmem:[%s163] sm:$0xff]
        %vm187 = vcmask 261120
        %v188 = vsel %vm187, %v186, 0.0
        %189 = vadd.xlane.f32.xlu0 %v188
        %v190 = vpop.xlane.xlu0 %189
        %v191 = vmul.f32 %v186, %v186
        %v192 = vsel %vm187, %v191, 0.0
        %193 = vadd.xlane.f32.xlu0 %v192
        %v194 = vpop.xlane.xlu0 %193
        %v195 = vmul.f32 %v190, 0.03125
        %v196 = vmul.f32 %v190, %v195
        %v197 = vsub.f32 %v194, %v196
        %v198 = vmul.f32 %v197, 0.032258064
        %v199 = vmax.f32 %v198, 0.0
        %v200 = vrsqrt.pop %v199
        %v201 = vmul.f32 %v199, %v200
        %vm202 = vcmp.eq.f32.partialorder %v199, inf
        %v203 = vsel %vm202, %v199, %v201
        %vm204 = vcmp.eq.f32.partialorder %v199, 0.0
        %v205 = vand.u32 %v199, 2147483648
        %v206 = vsel %vm204, %v205, %v203
        %v207 = vadd.f32 %v206, 1e-06
        %v208 = vrcp.pop %v207
        %v209 = vmul.f32 1.0, %v208
        %v210 = vld [vmem:[%s1] sm:$0x1]
        %v211 = vld [vmem:[%s2] sm:$0x1]
        %v212 = vsub.f32 %v186, %v195
        %v213 = vmul.f32 %v212, %v209
        %v215 = vlaneseq
        %v216 = vshrl.u32 %v215, 7
        %v217 = vsub.s32 0, %v216
        %v218 = vrot.slane %v210, %v217
        %v220 = vmul.f32 %v213, %v218
        %v222 = vlaneseq
        %v223 = vshrl.u32 %v222, 7
        %v224 = vsub.s32 0, %v223
        %v225 = vrot.slane %v211, %v224
        %v227 = vadd.f32 %v220, %v225
        %228 = vst.msk [vmem:[%s185] sm:$0xff] %vm187, %v227
        %s229 = sand.u32 %s96, 1
        %s230 = scalar_lea.sflag [#allocation4], %s229
        %s231 = sand.u32 %s96, 1
        %s232 = smul.addr %s231, 8
        %s233 = scalar_lea.vmem [#allocation5], %s232
        // Predicated region
        $region37: #{tpu_custom_call.1} parent=31 // pred_check
          %p234 = pneg %p106
        $region38: #{tpu_custom_call.1} parent=31 // pred_check_branch
          %236 = sbr.rel (%p234) target = $region40
        $region39: #{tpu_custom_call.1} parent=31 // pred_region
          %s238 = ssub.s32 128, 128
          %239 = vsyncadd %s230, %s238
          %s240 = smul.addr %s20, 128
          %s241 = scalar_lea.hbm %s3, %s240
          %s243 = sshll.u32 %s233, 4
          %s244 = int_to_ptr.vmem [resolvable:$true] %s243
          %246 = dma.vmem_to_hbm [thread:$0]  %s244, 128, %s241, %s230
        $region40: #{tpu_custom_call.1} parent=31 // pred_fallthru
          _
      $region32: #{tpu_custom_call.1} parent=5 // pred_fallthru
        _
      %p247 = scmp.le.s32.totalorder 2, %s15
      // Predicated region
      $region41: #{tpu_custom_call.1} parent=5 // pred_check
        %p248 = pneg %p247
      $region42: #{tpu_custom_call.1} parent=5 // pred_check_branch
        %250 = sbr.rel (%p248) target = $region44
      $region43: #{tpu_custom_call.1} parent=5 // pred_region
        %s251 = ssub.s32 %s15, 2
        // Predicated region
        $region45: #{tpu_custom_call.1} parent=43 // pred_check
          %p252 = pneg %p112
        $region46: #{tpu_custom_call.1} parent=43 // pred_check_branch
          %254 = sbr.rel (%p252) target = $region48
        $region47: #{tpu_custom_call.1} parent=43 // pred_region
          %s255 = sand.u32 %s97, 1
          %s256 = scalar_lea.sflag [#allocation4], %s255
          %s257 = sand.u32 %s97, 1
          %s258 = smul.addr %s257, 8
          %s259 = scalar_lea.vmem [#allocation5], %s258
          %260 = dma.done %s256, 128
        $region48: #{tpu_custom_call.1} parent=43 // pred_fallthru
          _
      $region44: #{tpu_custom_call.1} parent=5 // pred_fallthru
        _
    $region6: #{tpu_custom_call.1} parent=1 // loop_footer
      %s19 = sadd.s32 1, %s15
    $region7: #{tpu_custom_call.1} parent=1 // loop_footer_branch
      %14 = sbr.rel target = $region3
    $region8: #{tpu_custom_call.1} parent=1 // loop_exit
      _
    %261 = vsyncpa [#allocation3], 1
    %s262 = scalar_lea.sflag [#allocation3], 1
    %263 = vsyncpa %s262, 1
    %264 = vsyncpa [#allocation4], 1
    %s265 = scalar_lea.sflag [#allocation4], 1
    %266 = vsyncpa %s265, 1

</llo_original>
